<compile_context>
chip_gen: v5e
topology: v5e:2x2
jax: 0.10.0
libtpu: 0.0.40
codegen_flags: <defaults>
</compile_context>

<pallas_src>
import jax
import jax.numpy as jnp
from jax.experimental import pallas as pl
from jax.experimental.pallas import tpu as pltpu

IN_DIM = 4
H1, H2, H3 = 64, 256, 128
OUT_DIM = 80
OUT_PAD = 128          # lane-dense padded output width
PAD_NEG = -1e30        # f32 bias for pad columns -> exp() == 0 under softmax


def _round_up(x, m):
    return ((x + m - 1) // m) * m


def _choose_tile_b(B, max_tile=2048, min_steps_large=4):
    """Pick a batch tile that amortizes per-step overhead (~0.35 us) while
    keeping >=2 grid steps when the batch permits (v7x megacore + pipelining).
    """
    B8 = _round_up(max(B, 8), 8)
    if B8 <= 256:
        return B8                                   # tiny batch: single step
    if B8 <= 2 * max_tile:
        return _round_up(pl.cdiv(B8, 2), 8)         # 2 steps -> both TCs busy
    tile = max_tile                                 # large batch: big tiles,
    while B8 < min_steps_large * tile and tile > 256:   # but >= 4 steps
        tile //= 2
    return tile


def _vmem_limit_bytes(tile_b):
    """Per-step VMEM budget (includes the 4->128 lane padding of the x block),
    with headroom; 32 MiB floor raises v5e's 16 MiB default scoped limit and
    stays well inside v7x's 64 MiB physical VMEM."""
    lane = 128
    x_blk = tile_b * lane * 4                       # lane-padded f32 x tile
    out_blk = tile_b * OUT_PAD * 4
    weights = (IN_DIM * H1 * 4 + H1 * 4 + H1 * H2 * 2 + H2 * 4
               + H2 * H3 * 2 + H3 * 4 + H3 * OUT_PAD * 2 + OUT_PAD * 4)
    inter = tile_b * (H1 + H2 + H3 + 2 * OUT_PAD) * 4   # f32 intermediates
    budget = 2 * (x_blk + out_blk) + 2 * weights + 2 * inter
    return int(min(max(budget, 32 << 20), 48 << 20))


def relation_kernel(x_ref, w1_ref, b1_ref, w2_ref, b2_ref,
                    w3_ref, b3_ref, w4_ref, b4_ref, o_ref):
    x = x_ref[...]                         # (TB, 4)  f32
    w1 = w1_ref[...]                       # (4, 64)  f32

    # ---- Layer 1 (K=4): VPU broadcast-MACs; accumulator seeded with b1. ----
    h = b1_ref[...] + x[:, 0:1] * w1[0:1, :]
    for k in range(1, IN_DIM):
        h = h + x[:, k:k + 1] * w1[k:k + 1, :]
    h = jnp.maximum(h, 0.0)                                      # (TB, 64) f32

    # ---- Layers 2-4: bf16 MXU matmuls with f32 accumulation. ----
    h = jnp.dot(h.astype(jnp.bfloat16), w2_ref[...],
                preferred_element_type=jnp.float32) + b2_ref[...]
    h = jnp.maximum(h, 0.0)                                      # (TB, 256) f32

    h = jnp.dot(h.astype(jnp.bfloat16), w3_ref[...],
                preferred_element_type=jnp.float32) + b3_ref[...]
    h = jnp.maximum(h, 0.0)                                      # (TB, 128) f32

    logits = jnp.dot(h.astype(jnp.bfloat16), w4_ref[...],
                     preferred_element_type=jnp.float32) + b4_ref[...]
    # logits: (TB, 128); columns 80..127 carry f32 bias -1e30 -> exp == 0.

    # ---- Numerically stable softmax over the (padded) lane axis. ----
    m = jnp.max(logits, axis=-1, keepdims=True)
    e = jnp.exp(logits - m)
    denom = jnp.sum(e, axis=-1, keepdims=True)
    # EUP approx reciprocal + one Newton step on the (TB,1) denom only:
    # near-exact f32 normalization (rows sum to 1 within ~1e-6) at VPU cost
    # of two extra ops per row.
    inv = pl.reciprocal(denom, approx=True)
    inv = inv * (2.0 - denom * inv)
    o_ref[...] = (e * inv).astype(o_ref.dtype)


def relation_forward(x, kernel_params, max_tile_b=2048):
    """x: (B, 4) f32 -> (B, 80) f32 softmax probabilities."""
    w1, b1, w2, b2, w3, b3, w4p, b4p = kernel_params
    B = x.shape[0]

    tile_b = _choose_tile_b(B, max_tile=max_tile_b)
    B_pad = _round_up(max(B, tile_b), tile_b)
    if B_pad != B:
        x = jnp.pad(x, ((0, B_pad - B), (0, 0)))

    def resident(arr):
        # Full-block spec, same block every grid step -> stays VMEM-resident.
        return pl.BlockSpec(arr.shape, lambda i: (0, 0))

    out = pl.pallas_call(
        relation_kernel,
        out_shape=jax.ShapeDtypeStruct((B_pad, OUT_PAD), jnp.float32),
        grid_spec=pltpu.PrefetchScalarGridSpec(
            num_scalar_prefetch=0,
            grid=(B_pad // tile_b,),
            in_specs=[
                pl.BlockSpec((tile_b, IN_DIM), lambda i: (i, 0)),
                resident(w1), resident(b1),
                resident(w2), resident(b2),
                resident(w3), resident(b3),
                resident(w4p), resident(b4p),
            ],
            out_specs=pl.BlockSpec((tile_b, OUT_PAD), lambda i: (i, 0)),
        ),
        compiler_params=pltpu.CompilerParams(
            dimension_semantics=("parallel",),
            vmem_limit_bytes=_vmem_limit_bytes(tile_b)),
    )(x, w1, b1, w2, b2, w3, b3, w4p, b4p)

    return out[:B, :OUT_DIM]


def init_params(key):
    """f32 params mirroring PyTorch nn.Linear (weights stored (in, out))."""
    dims = [(IN_DIM, H1), (H1, H2), (H2, H3), (H3, OUT_DIM)]
    params = []
    for din, dout in dims:
        kw, kb, key = jax.random.split(key, 3)
        bound = 1.0 / (din ** 0.5)
        w = jax.random.uniform(kw, (din, dout), jnp.float32, -bound, bound)
        b = jax.random.uniform(kb, (1, dout), jnp.float32, -bound, bound)
        params += [w, b]
    return tuple(params)


def pack_params(params):
    """Pad w4/b4 to a lane-dense 128-wide output and cast MXU weights to bf16.
    b4p (and the -1e30 pad biases) stay f32 so exp(pad logits) == 0 exactly."""
    w1, b1, w2, b2, w3, b3, w4, b4 = params
    w4p = jnp.pad(w4, ((0, 0), (0, OUT_PAD - OUT_DIM)))
    b4p = jnp.pad(b4, ((0, 0), (0, OUT_PAD - OUT_DIM)), constant_values=PAD_NEG)
    return (w1, b1,
            w2.astype(jnp.bfloat16), b2,
            w3.astype(jnp.bfloat16), b3,
            w4p.astype(jnp.bfloat16), b4p)


def reference(x, params):
    w1, b1, w2, b2, w3, b3, w4, b4 = params
    h = jnp.maximum(x @ w1 + b1, 0.0)
    h = jnp.maximum(h @ w2 + b2, 0.0)
    h = jnp.maximum(h @ w3 + b3, 0.0)
    return jax.nn.softmax(h @ w4 + b4, axis=-1)


if __name__ == "__main__":
    key = jax.random.PRNGKey(0)
    kx, kp = jax.random.split(key)

    B = 8
    x = jax.random.normal(kx, (B, IN_DIM), dtype=jnp.float32)
    params = init_params(kp)
    kernel_params = pack_params(params)

    out = relation_forward(x, kernel_params)
    out = jax.block_until_ready(out)

    assert out.shape == (B, OUT_DIM)
    # Softmax rows sum to 1 (pad columns contribute exactly 0; normalization
    # uses a Newton-refined reciprocal, so this is tight).
    assert bool(jnp.allclose(jnp.sum(out, axis=-1), 1.0, atol=1e-4))
    # Matches the f32 reference to within bf16 matmul tolerance.
    ref = reference(x, params)
    assert bool(jnp.allclose(out, ref, atol=2e-2))

    print("KERNEL_OK")
</pallas_src>

<mosaic_0001>
module attributes {stable_mosaic.version = 11 : i64} {
  func.func @relation_kernel(%arg0: i32, %arg1: memref<8x4xf32, #tpu.memory_space<vmem>>, %arg2: memref<4x64xf32, #tpu.memory_space<vmem>>, %arg3: memref<1x64xf32, #tpu.memory_space<vmem>>, %arg4: memref<64x256xbf16, #tpu.memory_space<vmem>>, %arg5: memref<1x256xf32, #tpu.memory_space<vmem>>, %arg6: memref<256x128xbf16, #tpu.memory_space<vmem>>, %arg7: memref<1x128xf32, #tpu.memory_space<vmem>>, %arg8: memref<128x128xbf16, #tpu.memory_space<vmem>>, %arg9: memref<1x128xf32, #tpu.memory_space<vmem>>, %arg10: memref<8x128xf32, #tpu.memory_space<vmem>>) attributes {dimension_semantics = [#tpu.dimension_semantics<parallel>], iteration_bounds = array<i64: 1>, scalar_prefetch = 0 : i64, scratch_operands = 0 : i64, tpu.core_type = #tpu.core_type<tc>, window_params = [{transform_indices = @transform_0, window_bounds = array<i64: 8, 4>}, {pipeline_mode = #tpu.pipeline_mode<synchronous>, transform_indices = @transform_1, window_bounds = array<i64: 4, 64>}, {pipeline_mode = #tpu.pipeline_mode<synchronous>, transform_indices = @transform_2, window_bounds = array<i64: 1, 64>}, {pipeline_mode = #tpu.pipeline_mode<synchronous>, transform_indices = @transform_3, window_bounds = array<i64: 64, 256>}, {pipeline_mode = #tpu.pipeline_mode<synchronous>, transform_indices = @transform_4, window_bounds = array<i64: 1, 256>}, {pipeline_mode = #tpu.pipeline_mode<synchronous>, transform_indices = @transform_5, window_bounds = array<i64: 256, 128>}, {pipeline_mode = #tpu.pipeline_mode<synchronous>, transform_indices = @transform_6, window_bounds = array<i64: 1, 128>}, {pipeline_mode = #tpu.pipeline_mode<synchronous>, transform_indices = @transform_7, window_bounds = array<i64: 128, 128>}, {pipeline_mode = #tpu.pipeline_mode<synchronous>, transform_indices = @transform_8, window_bounds = array<i64: 1, 128>}, {transform_indices = @transform_9, window_bounds = array<i64: 8, 128>}]} {
    %c0 = arith.constant 0 : index
    %c0_0 = arith.constant 0 : index
    %0 = vector.load %arg1[%c0, %c0_0] : memref<8x4xf32, #tpu.memory_space<vmem>>, vector<8x4xf32>
    %c0_1 = arith.constant 0 : index
    %c0_2 = arith.constant 0 : index
    %1 = vector.load %arg2[%c0_1, %c0_2] : memref<4x64xf32, #tpu.memory_space<vmem>>, vector<4x64xf32>
    %c0_3 = arith.constant 0 : index
    %c0_4 = arith.constant 0 : index
    %2 = vector.load %arg3[%c0_3, %c0_4] : memref<1x64xf32, #tpu.memory_space<vmem>>, vector<1x64xf32>
    %3 = vector.extract_strided_slice %0 {offsets = [0, 0], sizes = [8, 1], strides = [1, 1]} : vector<8x4xf32> to vector<8x1xf32>
    %4 = vector.extract_strided_slice %1 {offsets = [0, 0], sizes = [1, 64], strides = [1, 1]} : vector<4x64xf32> to vector<1x64xf32>
    %5 = vector.broadcast %3 : vector<8x1xf32> to vector<8x64xf32>
    %6 = vector.broadcast %4 : vector<1x64xf32> to vector<8x64xf32>
    %7 = arith.mulf %5, %6 : vector<8x64xf32>
    %8 = vector.broadcast %2 : vector<1x64xf32> to vector<8x64xf32>
    %9 = arith.addf %8, %7 : vector<8x64xf32>
    %10 = vector.extract_strided_slice %0 {offsets = [0, 1], sizes = [8, 1], strides = [1, 1]} : vector<8x4xf32> to vector<8x1xf32>
    %11 = vector.extract_strided_slice %1 {offsets = [1, 0], sizes = [1, 64], strides = [1, 1]} : vector<4x64xf32> to vector<1x64xf32>
    %12 = vector.broadcast %10 : vector<8x1xf32> to vector<8x64xf32>
    %13 = vector.broadcast %11 : vector<1x64xf32> to vector<8x64xf32>
    %14 = arith.mulf %12, %13 : vector<8x64xf32>
    %15 = arith.addf %9, %14 : vector<8x64xf32>
    %16 = vector.extract_strided_slice %0 {offsets = [0, 2], sizes = [8, 1], strides = [1, 1]} : vector<8x4xf32> to vector<8x1xf32>
    %17 = vector.extract_strided_slice %1 {offsets = [2, 0], sizes = [1, 64], strides = [1, 1]} : vector<4x64xf32> to vector<1x64xf32>
    %18 = vector.broadcast %16 : vector<8x1xf32> to vector<8x64xf32>
    %19 = vector.broadcast %17 : vector<1x64xf32> to vector<8x64xf32>
    %20 = arith.mulf %18, %19 : vector<8x64xf32>
    %21 = arith.addf %15, %20 : vector<8x64xf32>
    %22 = vector.extract_strided_slice %0 {offsets = [0, 3], sizes = [8, 1], strides = [1, 1]} : vector<8x4xf32> to vector<8x1xf32>
    %23 = vector.extract_strided_slice %1 {offsets = [3, 0], sizes = [1, 64], strides = [1, 1]} : vector<4x64xf32> to vector<1x64xf32>
    %24 = vector.broadcast %22 : vector<8x1xf32> to vector<8x64xf32>
    %25 = vector.broadcast %23 : vector<1x64xf32> to vector<8x64xf32>
    %26 = arith.mulf %24, %25 : vector<8x64xf32>
    %27 = arith.addf %21, %26 : vector<8x64xf32>
    %cst = arith.constant 0.000000e+00 : f32
    %28 = vector.broadcast %cst : f32 to vector<8x64xf32>
    %29 = arith.maximumf %27, %28 : vector<8x64xf32>
    %30 = arith.truncf %29 : vector<8x64xf32> to vector<8x64xbf16>
    %c0_5 = arith.constant 0 : index
    %c0_6 = arith.constant 0 : index
    %31 = vector.load %arg4[%c0_5, %c0_6] : memref<64x256xbf16, #tpu.memory_space<vmem>>, vector<64x256xbf16>
    %cst_7 = arith.constant dense<0.000000e+00> : vector<8x256xf32>
    %32 = tpu.matmul %30, %31, %cst_7 {dimension_numbers = #tpu.dot_dimension_numbers<[1], [0], [0], [1], [0, 0, 1, 1], [], []>} : vector<8x64xbf16>, vector<64x256xbf16>, vector<8x256xf32> -> vector<8x256xf32>
    %c0_8 = arith.constant 0 : index
    %c0_9 = arith.constant 0 : index
    %33 = vector.load %arg5[%c0_8, %c0_9] : memref<1x256xf32, #tpu.memory_space<vmem>>, vector<1x256xf32>
    %34 = vector.broadcast %33 : vector<1x256xf32> to vector<8x256xf32>
    %35 = arith.addf %32, %34 : vector<8x256xf32>
    %cst_10 = arith.constant 0.000000e+00 : f32
    %36 = vector.broadcast %cst_10 : f32 to vector<8x256xf32>
    %37 = arith.maximumf %35, %36 : vector<8x256xf32>
    %38 = arith.truncf %37 : vector<8x256xf32> to vector<8x256xbf16>
    %c0_11 = arith.constant 0 : index
    %c0_12 = arith.constant 0 : index
    %39 = vector.load %arg6[%c0_11, %c0_12] : memref<256x128xbf16, #tpu.memory_space<vmem>>, vector<256x128xbf16>
    %cst_13 = arith.constant dense<0.000000e+00> : vector<8x128xf32>
    %40 = tpu.matmul %38, %39, %cst_13 {dimension_numbers = #tpu.dot_dimension_numbers<[1], [0], [0], [1], [0, 0, 1, 1], [], []>} : vector<8x256xbf16>, vector<256x128xbf16>, vector<8x128xf32> -> vector<8x128xf32>
    %c0_14 = arith.constant 0 : index
    %c0_15 = arith.constant 0 : index
    %41 = vector.load %arg7[%c0_14, %c0_15] : memref<1x128xf32, #tpu.memory_space<vmem>>, vector<1x128xf32>
    %42 = vector.broadcast %41 : vector<1x128xf32> to vector<8x128xf32>
    %43 = arith.addf %40, %42 : vector<8x128xf32>
    %cst_16 = arith.constant 0.000000e+00 : f32
    %44 = vector.broadcast %cst_16 : f32 to vector<8x128xf32>
    %45 = arith.maximumf %43, %44 : vector<8x128xf32>
    %46 = arith.truncf %45 : vector<8x128xf32> to vector<8x128xbf16>
    %c0_17 = arith.constant 0 : index
    %c0_18 = arith.constant 0 : index
    %47 = vector.load %arg8[%c0_17, %c0_18] : memref<128x128xbf16, #tpu.memory_space<vmem>>, vector<128x128xbf16>
    %cst_19 = arith.constant dense<0.000000e+00> : vector<8x128xf32>
    %48 = tpu.matmul %46, %47, %cst_19 {dimension_numbers = #tpu.dot_dimension_numbers<[1], [0], [0], [1], [0, 0, 1, 1], [], []>} : vector<8x128xbf16>, vector<128x128xbf16>, vector<8x128xf32> -> vector<8x128xf32>
    %c0_20 = arith.constant 0 : index
    %c0_21 = arith.constant 0 : index
    %49 = vector.load %arg9[%c0_20, %c0_21] : memref<1x128xf32, #tpu.memory_space<vmem>>, vector<1x128xf32>
    %50 = vector.broadcast %49 : vector<1x128xf32> to vector<8x128xf32>
    %51 = arith.addf %48, %50 : vector<8x128xf32>
    %cst_22 = arith.constant dense<0xFF800000> : vector<8xf32>
    %52 = vector.multi_reduction <maximumf>, %51, %cst_22 [1] : vector<8x128xf32> to vector<8xf32>
    %53 = vector.shape_cast %52 : vector<8xf32> to vector<8x1xf32>
    %54 = vector.broadcast %53 : vector<8x1xf32> to vector<8x128xf32>
    %55 = arith.subf %51, %54 : vector<8x128xf32>
    %56 = math.exp %55 : vector<8x128xf32>
    %cst_23 = arith.constant dense<0.000000e+00> : vector<8xf32>
    %57 = vector.multi_reduction <add>, %56, %cst_23 [1] : vector<8x128xf32> to vector<8xf32>
    %58 = vector.shape_cast %57 : vector<8xf32> to vector<8x1xf32>
    %59 = tpu.reciprocal %58 {approx = true} : vector<8x1xf32> -> vector<8x1xf32>
    %60 = arith.mulf %58, %59 : vector<8x1xf32>
    %cst_24 = arith.constant 2.000000e+00 : f32
    %61 = vector.broadcast %cst_24 : f32 to vector<8x1xf32>
    %62 = arith.subf %61, %60 : vector<8x1xf32>
    %63 = arith.mulf %59, %62 : vector<8x1xf32>
    %64 = vector.broadcast %63 : vector<8x1xf32> to vector<8x128xf32>
    %65 = arith.mulf %56, %64 : vector<8x128xf32>
    %c0_25 = arith.constant 0 : index
    %c0_26 = arith.constant 0 : index
    %66 = vector.load %arg10[%c0_25, %c0_26] : memref<8x128xf32, #tpu.memory_space<vmem>>, vector<8x128xf32>
    tpu.vector_store %arg10[%c0_25, %c0_26], %65 {strides = array<i32>} : memref<8x128xf32, #tpu.memory_space<vmem>>, vector<8x128xf32>,
    return
  }
  func.func @transform_0(%arg0: i32) -> (i32, i32) {
    %c0_i32 = arith.constant 0 : i32
    %c0_i32_0 = arith.constant 0 : i32
    return %arg0, %c0_i32 : i32, i32
  }
  func.func @transform_1(%arg0: i32) -> (i32, i32) {
    %c0_i32 = arith.constant 0 : i32
    %c0_i32_0 = arith.constant 0 : i32
    %c0_i32_1 = arith.constant 0 : i32
    return %c0_i32, %c0_i32_0 : i32, i32
  }
  func.func @transform_2(%arg0: i32) -> (i32, i32) {
    %c0_i32 = arith.constant 0 : i32
    %c0_i32_0 = arith.constant 0 : i32
    %c0_i32_1 = arith.constant 0 : i32
    return %c0_i32, %c0_i32_0 : i32, i32
  }
  func.func @transform_3(%arg0: i32) -> (i32, i32) {
    %c0_i32 = arith.constant 0 : i32
    %c0_i32_0 = arith.constant 0 : i32
    %c0_i32_1 = arith.constant 0 : i32
    return %c0_i32, %c0_i32_0 : i32, i32
  }
  func.func @transform_4(%arg0: i32) -> (i32, i32) {
    %c0_i32 = arith.constant 0 : i32
    %c0_i32_0 = arith.constant 0 : i32
    %c0_i32_1 = arith.constant 0 : i32
    return %c0_i32, %c0_i32_0 : i32, i32
  }
  func.func @transform_5(%arg0: i32) -> (i32, i32) {
    %c0_i32 = arith.constant 0 : i32
    %c0_i32_0 = arith.constant 0 : i32
    %c0_i32_1 = arith.constant 0 : i32
    return %c0_i32, %c0_i32_0 : i32, i32
  }
  func.func @transform_6(%arg0: i32) -> (i32, i32) {
    %c0_i32 = arith.constant 0 : i32
    %c0_i32_0 = arith.constant 0 : i32
    %c0_i32_1 = arith.constant 0 : i32
    return %c0_i32, %c0_i32_0 : i32, i32
  }
  func.func @transform_7(%arg0: i32) -> (i32, i32) {
    %c0_i32 = arith.constant 0 : i32
    %c0_i32_0 = arith.constant 0 : i32
    %c0_i32_1 = arith.constant 0 : i32
    return %c0_i32, %c0_i32_0 : i32, i32
  }
  func.func @transform_8(%arg0: i32) -> (i32, i32) {
    %c0_i32 = arith.constant 0 : i32
    %c0_i32_0 = arith.constant 0 : i32
    %c0_i32_1 = arith.constant 0 : i32
    return %c0_i32, %c0_i32_0 : i32, i32
  }
  func.func @transform_9(%arg0: i32) -> (i32, i32) {
    %c0_i32 = arith.constant 0 : i32
    %c0_i32_0 = arith.constant 0 : i32
    return %arg0, %c0_i32 : i32, i32
  }
}

</mosaic_0001>

<llo_original>
// kernel: tpu_custom_call.1
$region0: #{tpu_custom_call.1}
  #allocation0 [shape = 'u32[]', space=smem, size = 0x4, offset = 0x4, fixed_abs, tag = 'smem constant byte address 0x4 - core index']
  #allocation1 [shape = 'u32[72,128]{1,0:T(1,128)}', space=vmem, size = 0x9000, scoped, tag = 'internal scratch']
  %s0 = inlined_call_operand.vmem [shape: f32[8,4], index: 0, kind: input, shape index: {}]
  %s1 = inlined_call_operand.vmem [shape: f32[4,64], index: 1, kind: input, shape index: {}]
  %s2 = inlined_call_operand.vmem [shape: f32[1,64], index: 2, kind: input, shape index: {}]
  %s3 = inlined_call_operand.hbm [shape: bf16[64,256], index: 3, kind: input, shape index: {}]
  %s4 = inlined_call_operand.vmem [shape: f32[1,256], index: 4, kind: input, shape index: {}]
  %s5 = inlined_call_operand.hbm [shape: bf16[256,128], index: 5, kind: input, shape index: {}]
  %s6 = inlined_call_operand.vmem [shape: f32[1,128], index: 6, kind: input, shape index: {}]
  %s7 = inlined_call_operand.hbm [shape: bf16[128,128], index: 7, kind: input, shape index: {}]
  %s8 = inlined_call_operand.vmem [shape: f32[1,128], index: 8, kind: input, shape index: {}]
  %s9 = inlined_call_operand.hbm [shape: f32[8,128], index: 9, kind: output, shape index: {}]
  %s10 = sld [smem:[#allocation0]]
  $region58: #{tpu_custom_call.1} parent=0
    _
  %s12 = ssub.s32 1, %s10
  %s13 = scalar_select 0, %s12, %s10
  $region1: #{tpu_custom_call.1} parent=0
    #allocation2 [shape = 'u8[32768]{0}', space=vmem, size = 0x8000, scoped, tag = 'input window, operand 3, single buffered']
    #allocation3 [shape = 's32[1]{0}', space=sflag, size = 0x4, scoped, tag = 'scoped memory for tpu_custom_call.1']
    #allocation4 [shape = 's32[1]{0}', space=sflag, size = 0x4, scoped, tag = 'scoped memory for tpu_custom_call.1']
    #allocation5 [shape = 'u8[65536]{0}', space=vmem, size = 0x10000, scoped, tag = 'input window, operand 5, single buffered']
    #allocation6 [shape = 's32[1]{0}', space=sflag, size = 0x4, scoped, tag = 'scoped memory for tpu_custom_call.1']
    #allocation7 [shape = 'u8[32768]{0}', space=vmem, size = 0x8000, scoped, tag = 'input window, operand 7, single buffered']
    #allocation8 [shape = 'u8[4096]{0}', space=vmem, size = 0x1000, scoped, tag = 'output window, operand 0, single buffered']
    %14 = vsyncpa [#allocation3], 0
    %15 = vsyncpa [#allocation6], 0
    %16 = vsyncpa [#allocation4], 0
    // Predicated region
    $region2: #{tpu_custom_call.1} parent=1 // pred_check
      _
    $region3: #{tpu_custom_call.1} parent=1 // pred_check_branch
      %18 = sbr.rel (0) target = $region5
    $region4: #{tpu_custom_call.1} parent=1 // pred_region
      _
    $region5: #{tpu_custom_call.1} parent=1 // pred_fallthru
      _
    // Predicated region
    $region6: #{tpu_custom_call.1} parent=1 // pred_check
      _
    $region7: #{tpu_custom_call.1} parent=1 // pred_check_branch
      %20 = sbr.rel (0) target = $region9
    $region8: #{tpu_custom_call.1} parent=1 // pred_region
      _
    $region9: #{tpu_custom_call.1} parent=1 // pred_fallthru
      _
    // Predicated region
    $region10: #{tpu_custom_call.1} parent=1 // pred_check
      _
    $region11: #{tpu_custom_call.1} parent=1 // pred_check_branch
      %22 = sbr.rel (0) target = $region13
    $region12: #{tpu_custom_call.1} parent=1 // pred_region
      _
    $region13: #{tpu_custom_call.1} parent=1 // pred_fallthru
      _
    // Predicated region
    $region14: #{tpu_custom_call.1} parent=1 // pred_check
      _
    $region15: #{tpu_custom_call.1} parent=1 // pred_check_branch
      %24 = sbr.rel (0) target = $region17
    $region16: #{tpu_custom_call.1} parent=1 // pred_region
      %26 = vsyncadd [#allocation3], 0
      %s27 = sshll.u32 %s3, 4
      %s28 = int_to_ptr.hbm [resolvable:$true] %s27
      %s29 = sshll.u32 [#allocation2], 4
      %s30 = int_to_ptr.vmem [resolvable:$true] %s29
      %35 = dma.hbm_to_vmem [thread:$0]  %s28, 1024, %s30, [#allocation3], 128, 128, 8
    $region17: #{tpu_custom_call.1} parent=1 // pred_fallthru
      _
    // Predicated region
    $region18: #{tpu_custom_call.1} parent=1 // pred_check
      _
    $region19: #{tpu_custom_call.1} parent=1 // pred_check_branch
      %37 = sbr.rel (0) target = $region21
    $region20: #{tpu_custom_call.1} parent=1 // pred_region
      _
    $region21: #{tpu_custom_call.1} parent=1 // pred_fallthru
      _
    // Predicated region
    $region22: #{tpu_custom_call.1} parent=1 // pred_check
      _
    $region23: #{tpu_custom_call.1} parent=1 // pred_check_branch
      %39 = sbr.rel (0) target = $region25
    $region24: #{tpu_custom_call.1} parent=1 // pred_region
      %41 = vsyncadd [#allocation6], 0
      %s42 = sshll.u32 %s5, 4
      %s43 = int_to_ptr.hbm [resolvable:$true] %s42
      %s44 = sshll.u32 [#allocation5], 4
      %s45 = int_to_ptr.vmem [resolvable:$true] %s44
      %50 = dma.hbm_to_vmem [thread:$0]  %s43, 2048, %s45, [#allocation6], 64, 64, 4
    $region25: #{tpu_custom_call.1} parent=1 // pred_fallthru
      _
    // Predicated region
    $region26: #{tpu_custom_call.1} parent=1 // pred_check
      _
    $region27: #{tpu_custom_call.1} parent=1 // pred_check_branch
      %52 = sbr.rel (0) target = $region29
    $region28: #{tpu_custom_call.1} parent=1 // pred_region
      _
    $region29: #{tpu_custom_call.1} parent=1 // pred_fallthru
      _
    // Predicated region
    $region30: #{tpu_custom_call.1} parent=1 // pred_check
      _
    $region31: #{tpu_custom_call.1} parent=1 // pred_check_branch
      %54 = sbr.rel (0) target = $region33
    $region32: #{tpu_custom_call.1} parent=1 // pred_region
      %56 = vsyncadd [#allocation6], 0
      %s57 = sshll.u32 %s7, 4
      %s58 = int_to_ptr.hbm [resolvable:$true] %s57
      %s59 = sshll.u32 [#allocation7], 4
      %s60 = int_to_ptr.vmem [resolvable:$true] %s59
      %65 = dma.hbm_to_vmem [thread:$0]  %s58, 1024, %s60, [#allocation6], 64, 64, 4
    $region33: #{tpu_custom_call.1} parent=1 // pred_fallthru
      _
    // Predicated region
    $region34: #{tpu_custom_call.1} parent=1 // pred_check
      _
    $region35: #{tpu_custom_call.1} parent=1 // pred_check_branch
      %67 = sbr.rel (0) target = $region37
    $region36: #{tpu_custom_call.1} parent=1 // pred_region
      _
    $region37: #{tpu_custom_call.1} parent=1 // pred_fallthru
      _
    // Predicated region
    $region38: #{tpu_custom_call.1} parent=1 // pred_check
      _
    $region39: #{tpu_custom_call.1} parent=1 // pred_check_branch
      %69 = sbr.rel (0) target = $region41
    $region40: #{tpu_custom_call.1} parent=1 // pred_region
      %71 = dma.done [#allocation3], 1024
    $region41: #{tpu_custom_call.1} parent=1 // pred_fallthru
      _
    // Predicated region
    $region42: #{tpu_custom_call.1} parent=1 // pred_check
      _
    $region43: #{tpu_custom_call.1} parent=1 // pred_check_branch
      %73 = sbr.rel (0) target = $region45
    $region44: #{tpu_custom_call.1} parent=1 // pred_region
      %75 = dma.done [#allocation6], 2048
    $region45: #{tpu_custom_call.1} parent=1 // pred_fallthru
      _
    // Predicated region
    $region46: #{tpu_custom_call.1} parent=1 // pred_check
      _
    $region47: #{tpu_custom_call.1} parent=1 // pred_check_branch
      %77 = sbr.rel (0) target = $region49
    $region48: #{tpu_custom_call.1} parent=1 // pred_region
      %79 = dma.done [#allocation6], 1024
    $region49: #{tpu_custom_call.1} parent=1 // pred_fallthru
      _
    %v81 = vld [vmem:[%s0] sm:$0xff]
    %v82 = vld [vmem:[%s1] sm:$0xf]
    %v83 = vld [vmem:[%s2] sm:$0x1]
    %85 = vset.pattern.permute.xlu0 0
    %86 = vperm.xlu0 %85, %v81
    %v87 = vpop.permute.xlu0 %86
    %v89 = vperm.slane %v82, 0
    %v90 = vmul.f32 %v87, %v89
    %v92 = vperm.slane %v83, 0
    %v94 = vadd.f32 %v92, %v90
    %95 = vset.pattern.permute.xlu0 1
    %96 = vperm.xlu0 %95, %v81
    %v97 = vpop.permute.xlu0 %96
    %v99 = vperm.slane %v82, 1
    %v100 = vmul.f32 %v97, %v99
    %v101 = vadd.f32 %v94, %v100
    %102 = vset.pattern.permute.xlu0 2
    %103 = vperm.xlu0 %102, %v81
    %v104 = vpop.permute.xlu0 %103
    %v106 = vperm.slane %v82, 2
    %v107 = vmul.f32 %v104, %v106
    %v108 = vadd.f32 %v101, %v107
    %109 = vset.pattern.permute.xlu0 3
    %110 = vperm.xlu0 %109, %v81
    %v111 = vpop.permute.xlu0 %110
    %v113 = vperm.slane %v82, 3
    %v114 = vmul.f32 %v111, %v113
    %v115 = vadd.f32 %v108, %v114
    %v116 = vmax.f32 %v115, 0.0
    %v117 = vpack.c.bf16 %v116, %v116
    %v118 = vld [vmem:[#allocation2] sm:$0xff]
    %v119 = vld [vmem:[#allocation2 + $0x8] sm:$0xff]
    %v120 = vld [vmem:[#allocation2 + $0x10] sm:$0xff]
    %v121 = vld [vmem:[#allocation2 + $0x18] sm:$0xff]
    %v122 = vld [vmem:[#allocation2 + $0x20] sm:$0xff]
    %v123 = vld [vmem:[#allocation2 + $0x28] sm:$0xff]
    %v124 = vld [vmem:[#allocation2 + $0x30] sm:$0xff]
    %v125 = vld [vmem:[#allocation2 + $0x38] sm:$0xff]
    %v126 = vld [vmem:[%s4] sm:$0x3]
    %v128 = vperm.slane %v126, 0
    %v129 = vperm.slane %v126, 1
    %v140 = vunpack.c.l.b16 %v118
    %v141 = vunpack.c.h.b16 %v118
    %v142 = vunpack.c.l.b16 %v119
    %v143 = vunpack.c.h.b16 %v119
    %v144 = vunpack.c.l.b16 %v120
    %v145 = vunpack.c.h.b16 %v120
    %v146 = vunpack.c.l.b16 %v121
    %v147 = vunpack.c.h.b16 %v121
    %v148 = vunpack.c.l.b16 %v122
    %v149 = vunpack.c.h.b16 %v122
    %v150 = vunpack.c.l.b16 %v123
    %v151 = vunpack.c.h.b16 %v123
    %v152 = vunpack.c.l.b16 %v124
    %v153 = vunpack.c.h.b16 %v124
    %v154 = vunpack.c.l.b16 %v125
    %v155 = vunpack.c.h.b16 %v125
    %v156 = vpack.c.b16 %v142, %v140
    %v157 = vpack.c.b16 %v143, %v141
    %v158 = vpack.c.b16 %v146, %v144
    %v159 = vpack.c.b16 %v147, %v145
    %v160 = vpack.c.b16 %v150, %v148
    %v161 = vpack.c.b16 %v151, %v149
    %v162 = vpack.c.b16 %v154, %v152
    %v163 = vpack.c.b16 %v155, %v153
    %vm172 = vcmask 523264
    %v174 = vsel %vm172, %v117, 0
    %176 = vmatpush.bf16.msra.mxu0 0
    %177 = vmatpush.bf16.msra.mxu0 0
    %178 = vmatpush.bf16.msra.mxu0 0
    %179 = vmatpush.bf16.msra.mxu0 0
    %180 = vmatpush.bf16.msra.mxu0 %v162
    %181 = vmatpush.bf16.msra.mxu0 %v160
    %182 = vmatpush.bf16.msra.mxu0 %v158
    %183 = vmatpush.bf16.msra.mxu0 %v156
    %184 = vmatmul.bf16.gmra.mxu0 %v174
    %v185 = vpop.f32.mrf.mxu0
    %v186 = vadd.f32 %v128, %v185
    %v187 = vpop.f32.mrf.mxu0
    %188 = vdwg.mxu0
    %189 = vmatpush.bf16.msra.mxu0 0
    %190 = vmatpush.bf16.msra.mxu0 0
    %191 = vmatpush.bf16.msra.mxu0 0
    %192 = vmatpush.bf16.msra.mxu0 0
    %193 = vmatpush.bf16.msra.mxu0 %v163
    %194 = vmatpush.bf16.msra.mxu0 %v161
    %195 = vmatpush.bf16.msra.mxu0 %v159
    %196 = vmatpush.bf16.msra.mxu0 %v157
    %197 = vmatmul.bf16.gmra.mxu0 %v174
    %v198 = vpop.f32.mrf.mxu0
    %v199 = vadd.f32 %v129, %v198
    %v200 = vpop.f32.mrf.mxu0
    %201 = vdwg.mxu0
    %v202 = vmax.f32 %v186, 0.0
    %v203 = vmax.f32 %v199, 0.0
    %v204 = vpack.c.bf16 %v202, %v202
    %v205 = vpack.c.bf16 %v203, %v203
    %v206 = vld [vmem:[#allocation5] sm:$0xf]
    %v207 = vld [vmem:[#allocation5 + $0x4] sm:$0xf]
    %v208 = vld [vmem:[#allocation5 + $0x8] sm:$0xf]
    %v209 = vld [vmem:[#allocation5 + $0xc] sm:$0xf]
    %v210 = vld [vmem:[#allocation5 + $0x10] sm:$0xf]
    %v211 = vld [vmem:[#allocation5 + $0x14] sm:$0xf]
    %v212 = vld [vmem:[#allocation5 + $0x18] sm:$0xf]
    %v213 = vld [vmem:[#allocation5 + $0x1c] sm:$0xf]
    %v214 = vld [vmem:[#allocation5 + $0x20] sm:$0xf]
    %v215 = vld [vmem:[#allocation5 + $0x24] sm:$0xf]
    %v216 = vld [vmem:[#allocation5 + $0x28] sm:$0xf]
    %v217 = vld [vmem:[#allocation5 + $0x2c] sm:$0xf]
    %v218 = vld [vmem:[#allocation5 + $0x30] sm:$0xf]
    %v219 = vld [vmem:[#allocation5 + $0x34] sm:$0xf]
    %v220 = vld [vmem:[#allocation5 + $0x38] sm:$0xf]
    %v221 = vld [vmem:[#allocation5 + $0x3c] sm:$0xf]
    %v222 = vld [vmem:[#allocation5 + $0x40] sm:$0xf]
    %v223 = vld [vmem:[#allocation5 + $0x44] sm:$0xf]
    %v224 = vld [vmem:[#allocation5 + $0x48] sm:$0xf]
    %v225 = vld [vmem:[#allocation5 + $0x4c] sm:$0xf]
    %v226 = vld [vmem:[#allocation5 + $0x50] sm:$0xf]
    %v227 = vld [vmem:[#allocation5 + $0x54] sm:$0xf]
    %v228 = vld [vmem:[#allocation5 + $0x58] sm:$0xf]
    %v229 = vld [vmem:[#allocation5 + $0x5c] sm:$0xf]
    %v230 = vld [vmem:[#allocation5 + $0x60] sm:$0xf]
    %v231 = vld [vmem:[#allocation5 + $0x64] sm:$0xf]
    %v232 = vld [vmem:[#allocation5 + $0x68] sm:$0xf]
    %v233 = vld [vmem:[#allocation5 + $0x6c] sm:$0xf]
    %v234 = vld [vmem:[#allocation5 + $0x70] sm:$0xf]
    %v235 = vld [vmem:[#allocation5 + $0x74] sm:$0xf]
    %v236 = vld [vmem:[#allocation5 + $0x78] sm:$0xf]
    %v237 = vld [vmem:[#allocation5 + $0x7c] sm:$0xf]
    %v238 = vld [vmem:[%s6] sm:$0x1]
    %v240 = vperm.slane %v238, 0
    %v274 = vunpack.c.l.b16 %v206
    %v275 = vunpack.c.l.b16 %v207
    %v276 = vunpack.c.l.b16 %v208
    %v277 = vunpack.c.l.b16 %v209
    %v278 = vunpack.c.l.b16 %v210
    %v279 = vunpack.c.l.b16 %v211
    %v280 = vunpack.c.l.b16 %v212
    %v281 = vunpack.c.l.b16 %v213
    %v282 = vunpack.c.l.b16 %v214
    %v283 = vunpack.c.l.b16 %v215
    %v284 = vunpack.c.l.b16 %v216
    %v285 = vunpack.c.l.b16 %v217
    %v286 = vunpack.c.l.b16 %v218
    %v287 = vunpack.c.l.b16 %v219
    %v288 = vunpack.c.l.b16 %v220
    %v289 = vunpack.c.l.b16 %v221
    %v290 = vunpack.c.l.b16 %v222
    %v291 = vunpack.c.l.b16 %v223
    %v292 = vunpack.c.l.b16 %v224
    %v293 = vunpack.c.l.b16 %v225
    %v294 = vunpack.c.l.b16 %v226
    %v295 = vunpack.c.l.b16 %v227
    %v296 = vunpack.c.l.b16 %v228
    %v297 = vunpack.c.l.b16 %v229
    %v298 = vunpack.c.l.b16 %v230
    %v299 = vunpack.c.l.b16 %v231
    %v300 = vunpack.c.l.b16 %v232
    %v301 = vunpack.c.l.b16 %v233
    %v302 = vunpack.c.l.b16 %v234
    %v303 = vunpack.c.l.b16 %v235
    %v304 = vunpack.c.l.b16 %v236
    %v305 = vunpack.c.l.b16 %v237
    %v306 = vpack.c.b16 %v275, %v274
    %v307 = vpack.c.b16 %v277, %v276
    %v308 = vpack.c.b16 %v279, %v278
    %v309 = vpack.c.b16 %v281, %v280
    %v310 = vpack.c.b16 %v283, %v282
    %v311 = vpack.c.b16 %v285, %v284
    %v312 = vpack.c.b16 %v287, %v286
    %v313 = vpack.c.b16 %v289, %v288
    %v314 = vpack.c.b16 %v291, %v290
    %v315 = vpack.c.b16 %v293, %v292
    %v316 = vpack.c.b16 %v295, %v294
    %v317 = vpack.c.b16 %v297, %v296
    %v318 = vpack.c.b16 %v299, %v298
    %v319 = vpack.c.b16 %v301, %v300
    %v320 = vpack.c.b16 %v303, %v302
    %v321 = vpack.c.b16 %v305, %v304
    %338 = vmatpush.bf16.msra.mxu0 %v313
    %339 = vmatpush.bf16.msra.mxu0 %v312
    %340 = vmatpush.bf16.msra.mxu0 %v311
    %341 = vmatpush.bf16.msra.mxu0 %v310
    %342 = vmatpush.bf16.msra.mxu0 %v309
    %343 = vmatpush.bf16.msra.mxu0 %v308
    %344 = vmatpush.bf16.msra.mxu0 %v307
    %345 = vmatpush.bf16.msra.mxu0 %v306
    %346 = vmatmul.bf16.gmra.mxu0 %v204
    %v347 = vpop.f32.mrf.mxu0
    %v348 = vadd.f32 %v240, %v347
    %v349 = vpop.f32.mrf.mxu0
    %350 = vdwg.mxu0
    %351 = vmatpush.bf16.msra.mxu0 %v321
    %352 = vmatpush.bf16.msra.mxu0 %v320
    %353 = vmatpush.bf16.msra.mxu0 %v319
    %354 = vmatpush.bf16.msra.mxu0 %v318
    %355 = vmatpush.bf16.msra.mxu0 %v317
    %356 = vmatpush.bf16.msra.mxu0 %v316
    %357 = vmatpush.bf16.msra.mxu0 %v315
    %358 = vmatpush.bf16.msra.mxu0 %v314
    %359 = vmatmul.bf16.gmra.mxu0 %v205
    %v360 = vpop.f32.mrf.mxu0
    %v361 = vadd.f32 %v348, %v360
    %v362 = vpop.f32.mrf.mxu0
    %363 = vdwg.mxu0
    %v364 = vmax.f32 %v361, 0.0
    %v365 = vpack.c.bf16 %v364, %v364
    %v366 = vld [vmem:[#allocation7] sm:$0xf]
    %v367 = vld [vmem:[#allocation7 + $0x4] sm:$0xf]
    %v368 = vld [vmem:[#allocation7 + $0x8] sm:$0xf]
    %v369 = vld [vmem:[#allocation7 + $0xc] sm:$0xf]
    %v370 = vld [vmem:[#allocation7 + $0x10] sm:$0xf]
    %v371 = vld [vmem:[#allocation7 + $0x14] sm:$0xf]
    %v372 = vld [vmem:[#allocation7 + $0x18] sm:$0xf]
    %v373 = vld [vmem:[#allocation7 + $0x1c] sm:$0xf]
    %v374 = vld [vmem:[#allocation7 + $0x20] sm:$0xf]
    %v375 = vld [vmem:[#allocation7 + $0x24] sm:$0xf]
    %v376 = vld [vmem:[#allocation7 + $0x28] sm:$0xf]
    %v377 = vld [vmem:[#allocation7 + $0x2c] sm:$0xf]
    %v378 = vld [vmem:[#allocation7 + $0x30] sm:$0xf]
    %v379 = vld [vmem:[#allocation7 + $0x34] sm:$0xf]
    %v380 = vld [vmem:[#allocation7 + $0x38] sm:$0xf]
    %v381 = vld [vmem:[#allocation7 + $0x3c] sm:$0xf]
    %v382 = vld [vmem:[%s8] sm:$0x1]
    %v384 = vperm.slane %v382, 0
    %v402 = vunpack.c.l.b16 %v366
    %v403 = vunpack.c.l.b16 %v367
    %v404 = vunpack.c.l.b16 %v368
    %v405 = vunpack.c.l.b16 %v369
    %v406 = vunpack.c.l.b16 %v370
    %v407 = vunpack.c.l.b16 %v371
    %v408 = vunpack.c.l.b16 %v372
    %v409 = vunpack.c.l.b16 %v373
    %v410 = vunpack.c.l.b16 %v374
    %v411 = vunpack.c.l.b16 %v375
    %v412 = vunpack.c.l.b16 %v376
    %v413 = vunpack.c.l.b16 %v377
    %v414 = vunpack.c.l.b16 %v378
    %v415 = vunpack.c.l.b16 %v379
    %v416 = vunpack.c.l.b16 %v380
    %v417 = vunpack.c.l.b16 %v381
    %v418 = vpack.c.b16 %v403, %v402
    %v419 = vpack.c.b16 %v405, %v404
    %v420 = vpack.c.b16 %v407, %v406
    %v421 = vpack.c.b16 %v409, %v408
    %v422 = vpack.c.b16 %v411, %v410
    %v423 = vpack.c.b16 %v413, %v412
    %v424 = vpack.c.b16 %v415, %v414
    %v425 = vpack.c.b16 %v417, %v416
    %434 = vmatpush.bf16.msra.mxu0 %v425
    %435 = vmatpush.bf16.msra.mxu0 %v424
    %436 = vmatpush.bf16.msra.mxu0 %v423
    %437 = vmatpush.bf16.msra.mxu0 %v422
    %438 = vmatpush.bf16.msra.mxu0 %v421
    %439 = vmatpush.bf16.msra.mxu0 %v420
    %440 = vmatpush.bf16.msra.mxu0 %v419
    %441 = vmatpush.bf16.msra.mxu0 %v418
    %442 = vmatmul.bf16.gmra.mxu0 %v365
    %v443 = vpop.f32.mrf.mxu0
    %v444 = vadd.f32 %v384, %v443
    %v445 = vpop.f32.mrf.mxu0
    %446 = vdwg.mxu0
    %447 = vmax.xlane.f32.xlu0 %v444
    %v448 = vpop.xlane.xlu0 %447
    %v449 = vsub.f32 %v444, %v448
    %v450 = vmul.f32 %v449, 1.442695
    %v451 = vpow.pop %v450
    %452 = vadd.xlane.f32.xlu0 %v451
    %v453 = vpop.xlane.xlu0 %452
    %v454 = vrcp.pop %v453
    %v455 = vmul.f32 %v453, %v454
    %v456 = vsub.f32 2.0, %v455
    %v457 = vmul.f32 %v454, %v456
    %v458 = vmul.f32 %v451, %v457
    %459 = vst [vmem:[#allocation8] sm:$0xff] %v458
    // Predicated region
    $region50: #{tpu_custom_call.1} parent=1 // pred_check
      _
    $region51: #{tpu_custom_call.1} parent=1 // pred_check_branch
      %461 = sbr.rel (0) target = $region53
    $region52: #{tpu_custom_call.1} parent=1 // pred_region
      %463 = vsyncadd [#allocation4], 0
      %s465 = sshll.u32 [#allocation8], 4
      %s466 = int_to_ptr.vmem [resolvable:$true] %s465
      %s467 = sshll.u32 %s9, 4
      %s468 = int_to_ptr.hbm [resolvable:$true] %s467
      %470 = dma.vmem_to_hbm [thread:$0]  %s466, 128, %s468, [#allocation4]
    $region53: #{tpu_custom_call.1} parent=1 // pred_fallthru
      _
    // Predicated region
    $region54: #{tpu_custom_call.1} parent=1 // pred_check
      _
    $region55: #{tpu_custom_call.1} parent=1 // pred_check_branch
      %472 = sbr.rel (0) target = $region57
    $region56: #{tpu_custom_call.1} parent=1 // pred_region
      %474 = dma.done [#allocation4], 128
    $region57: #{tpu_custom_call.1} parent=1 // pred_fallthru
      _
    %475 = vsyncpa [#allocation3], 1
    %476 = vsyncpa [#allocation6], 1
    %477 = vsyncpa [#allocation4], 1

</llo_original>
